<compile_context>
chip_gen: v7x
topology: tpu7x:2x2x1
jax: 0.10.0
libtpu: 0.0.40
codegen_flags: <defaults>
</compile_context>

<pallas_src>
import math
from functools import partial

import jax
import jax.numpy as jnp
import numpy as np
from jax.experimental import pallas as pl
from jax.experimental.pallas import tpu as pltpu

COMPUTE_DTYPE = jnp.bfloat16  # MXU operand dtype; accumulation stays f32


def _vmem():
    return pl.BlockSpec(memory_space=pltpu.MemorySpace.VMEM)


# ------------------------- fused Pallas kernel -------------------------

def _gcn2_fused_kernel(a_ref, x_ref, w_in_ref, b_in_ref, w_eff_ref, shift_ref,
                       w_out_ref, b_out_ref, o_ref, *, alpha, num_layers,
                       compute_dtype):
    # Input Linear + ReLU:  h = relu(x @ W_in^T + b_in)
    h = jnp.dot(x_ref[...], w_in_ref[...],
                preferred_element_type=jnp.float32) + b_in_ref[...]
    h = jnp.maximum(h, 0.0)

    # Folded residual term alpha * x_0 (computed once, reused by every layer).
    x0_scaled = alpha * h

    # Prescaled adjacency A' = (1 - alpha) * A (bf16 MXU operand), loaded once.
    a = a_ref[...]

    # GCN2Conv + BN(eval, folded) + ReLU stack, fully unrolled (num_layers is static).
    for l in range(num_layers):
        # t = (1 - alpha) * (A @ h) + alpha * x_0
        t = jnp.dot(a, h.astype(compute_dtype),
                    preferred_element_type=jnp.float32) + x0_scaled
        # identity/weight mix + BN scale folded into W_eff; BN shift added separately.
        h = jnp.dot(t.astype(compute_dtype), w_eff_ref[l],
                    preferred_element_type=jnp.float32) + shift_ref[l]
        h = jnp.maximum(h, 0.0)
        # TODO(synk): training-mode dropout (stochastic) not implemented; eval mode => identity.

    # Output Linear
    y = jnp.dot(h.astype(compute_dtype), w_out_ref[...],
                preferred_element_type=jnp.float32) + b_out_ref[...]
    o_ref[...] = y.astype(o_ref.dtype)


# ------------------------- one-time operand folding -------------------------

def build_gcn2_operands(params, adj, *, alpha, theta, batchnorm,
                        compute_dtype=COMPUTE_DTYPE):
    """Fold alpha / beta / eval-mode BN into the adjacency and weights. Runs once."""
    hid = params["w_in"].shape[0]
    eye = jnp.eye(hid, dtype=jnp.float32)

    w_eff, shifts = [], []
    for i, lp in enumerate(params["layers"]):
        beta = math.log(theta / (i + 1) + 1.0)
        if batchnorm:
            eps = 1e-5
            scale = lp["bn_gamma"] / jnp.sqrt(lp["bn_var"] + eps)
            shift = lp["bn_beta"] - lp["bn_mean"] * scale
        else:
            scale = jnp.ones((hid,), jnp.float32)
            shift = jnp.zeros((hid,), jnp.float32)
        we = ((1.0 - beta) * eye + beta * lp["w1"]) * scale[None, :]
        w_eff.append(we.astype(compute_dtype))
        shifts.append(shift.reshape(1, -1).astype(jnp.float32))

    return {
        "a": ((1.0 - alpha) * adj).astype(compute_dtype),        # [N, N]
        "w_in_t": params["w_in"].T.astype(compute_dtype),        # [IN_C, HID]
        "b_in": params["b_in"].reshape(1, -1).astype(jnp.float32),
        "w_eff": jnp.stack(w_eff),                               # [L, HID, HID]
        "shifts": jnp.stack(shifts),                             # [L, 1, HID]
        "w_out_t": params["w_out"].T.astype(compute_dtype),      # [HID, OUT_C]
        "b_out": params["b_out"].reshape(1, -1).astype(jnp.float32),
    }


def gcn2_forward(x, ops, *, alpha, num_layers, compute_dtype=COMPUTE_DTYPE):
    n = x.shape[0]
    out_c = ops["w_out_t"].shape[1]
    kernel = partial(_gcn2_fused_kernel, alpha=alpha, num_layers=num_layers,
                     compute_dtype=compute_dtype)
    return pl.pallas_call(
        kernel,
        out_shape=jax.ShapeDtypeStruct((n, out_c), jnp.float32),
        in_specs=[_vmem()] * 8,
        out_specs=_vmem(),
    )(ops["a"], x.astype(compute_dtype), ops["w_in_t"], ops["b_in"],
      ops["w_eff"], ops["shifts"], ops["w_out_t"], ops["b_out"])


# ------------------------- references -------------------------

def gcn2_reference_f32(x, adj, params, *, alpha, theta, batchnorm):
    """PyTorch-faithful f32 reference (unfused, unfolded)."""
    h = jnp.maximum(x @ params["w_in"].T + params["b_in"], 0.0)
    x0 = h
    for i, lp in enumerate(params["layers"]):
        beta = math.log(theta / (i + 1) + 1.0)
        agg = adj @ h
        t = (1.0 - alpha) * agg + alpha * x0
        t = (1.0 - beta) * t + beta * (t @ lp["w1"])
        if batchnorm:
            eps = 1e-5
            scale = lp["bn_gamma"] / jnp.sqrt(lp["bn_var"] + eps)
            shift = lp["bn_beta"] - lp["bn_mean"] * scale
            t = t * scale + shift
        h = jnp.maximum(t, 0.0)
    return h @ params["w_out"].T + params["b_out"]


def gcn2_reference_folded(x, ops, *, alpha, num_layers, compute_dtype=COMPUTE_DTYPE):
    """Mirrors the fused kernel math exactly (same bf16 operands, f32 accumulation)."""
    def mm(a, b):
        return jnp.dot(a, b, preferred_element_type=jnp.float32)
    h = jnp.maximum(mm(x.astype(compute_dtype), ops["w_in_t"]) + ops["b_in"], 0.0)
    x0_scaled = alpha * h
    a = ops["a"]
    for l in range(num_layers):
        t = mm(a, h.astype(compute_dtype)) + x0_scaled
        h = jnp.maximum(mm(t.astype(compute_dtype), ops["w_eff"][l]) + ops["shifts"][l], 0.0)
    return mm(h.astype(compute_dtype), ops["w_out_t"]) + ops["b_out"]


# ------------------------- main -------------------------

if __name__ == "__main__":
    N, E = 64, 256
    IN_C, HID, OUT_C = 16, 32, 8
    NUM_LAYERS = 2
    ALPHA, THETA = 0.1, 0.5
    BATCHNORM = True

    key = jax.random.PRNGKey(0)
    ks = jax.random.split(key, 16)

    # graph data
    x = jax.random.normal(ks[0], (N, IN_C), dtype=jnp.float32)
    src = jax.random.randint(ks[1], (E,), 0, N)
    dst = jax.random.randint(ks[2], (E,), 0, N)
    edge_index = jnp.stack([src, dst], axis=0)                        # [2, E]
    edge_weight = jax.random.uniform(ks[3], (E,), dtype=jnp.float32)  # [E]

    # dense adjacency equivalent of scatter-sum message passing; built ONCE
    # (static graph) outside the forward.
    adj = jnp.zeros((N, N), jnp.float32).at[dst, src].add(edge_weight)

    # deterministic parameter init (shapes follow the PyTorch module)
    params = {
        "w_in": 0.1 * jax.random.normal(ks[4], (HID, IN_C), dtype=jnp.float32),
        "b_in": 0.1 * jax.random.normal(ks[5], (HID,), dtype=jnp.float32),
        "w_out": 0.1 * jax.random.normal(ks[6], (OUT_C, HID), dtype=jnp.float32),
        "b_out": 0.1 * jax.random.normal(ks[7], (OUT_C,), dtype=jnp.float32),
        "layers": [],
    }
    for i in range(NUM_LAYERS):
        lk = jax.random.split(ks[8 + i], 5)
        params["layers"].append({
            "w1": 0.1 * jax.random.normal(lk[0], (HID, HID), dtype=jnp.float32),
            "bn_gamma": 1.0 + 0.1 * jax.random.normal(lk[1], (HID,), dtype=jnp.float32),
            "bn_beta": 0.1 * jax.random.normal(lk[2], (HID,), dtype=jnp.float32),
            "bn_mean": 0.1 * jax.random.normal(lk[3], (HID,), dtype=jnp.float32),
            "bn_var": jnp.abs(1.0 + 0.1 * jax.random.normal(lk[4], (HID,), dtype=jnp.float32)),
        })

    # One-time folding of alpha / beta / BN into the operands (outside the hot path).
    ops = build_gcn2_operands(params, adj, alpha=ALPHA, theta=THETA,
                              batchnorm=BATCHNORM)

    out = gcn2_forward(x, ops, alpha=ALPHA, num_layers=NUM_LAYERS)
    out = jax.block_until_ready(out)
    assert out.shape == (N, OUT_C)

    # Tight check: kernel vs. an exact jnp mirror of the folded bf16 math.
    ref_folded = jax.block_until_ready(
        gcn2_reference_folded(x, ops, alpha=ALPHA, num_layers=NUM_LAYERS))
    np.testing.assert_allclose(np.asarray(out), np.asarray(ref_folded),
                               rtol=1e-4, atol=1e-4)

    # Loose check: kernel vs. the full-f32, unfolded PyTorch-faithful reference
    # (tolerance accounts for the bf16 MXU operands).
    ref_f32 = jax.block_until_ready(
        gcn2_reference_f32(x, adj, params, alpha=ALPHA, theta=THETA,
                           batchnorm=BATCHNORM))
    np.testing.assert_allclose(np.asarray(out), np.asarray(ref_f32),
                               rtol=2e-2, atol=2e-2)

    print("KERNEL_OK")
</pallas_src>

<mosaic_0001>
module attributes {stable_mosaic.version = 11 : i64} {
  func.func @_gcn2_fused_kernel(%arg0: memref<64x64xbf16, #tpu.memory_space<vmem>>, %arg1: memref<64x16xbf16, #tpu.memory_space<vmem>>, %arg2: memref<16x32xbf16, #tpu.memory_space<vmem>>, %arg3: memref<1x32xf32, #tpu.memory_space<vmem>>, %arg4: memref<2x32x32xbf16, #tpu.memory_space<vmem>>, %arg5: memref<2x1x32xf32, #tpu.memory_space<vmem>>, %arg6: memref<32x8xbf16, #tpu.memory_space<vmem>>, %arg7: memref<1x8xf32, #tpu.memory_space<vmem>>, %arg8: memref<64x8xf32, #tpu.memory_space<vmem>>) attributes {dimension_semantics = [], scalar_prefetch = 0 : i64, scratch_operands = 0 : i64, tpu.core_type = #tpu.core_type<tc>} {
    %c0 = arith.constant 0 : index
    %c0_0 = arith.constant 0 : index
    %0 = vector.load %arg1[%c0, %c0_0] : memref<64x16xbf16, #tpu.memory_space<vmem>>, vector<64x16xbf16>
    %c0_1 = arith.constant 0 : index
    %c0_2 = arith.constant 0 : index
    %1 = vector.load %arg2[%c0_1, %c0_2] : memref<16x32xbf16, #tpu.memory_space<vmem>>, vector<16x32xbf16>
    %cst = arith.constant dense<0.000000e+00> : vector<64x32xf32>
    %2 = tpu.matmul %0, %1, %cst {dimension_numbers = #tpu.dot_dimension_numbers<[1], [0], [0], [1], [0, 0, 1, 1], [], []>} : vector<64x16xbf16>, vector<16x32xbf16>, vector<64x32xf32> -> vector<64x32xf32>
    %c0_3 = arith.constant 0 : index
    %c0_4 = arith.constant 0 : index
    %3 = vector.load %arg3[%c0_3, %c0_4] : memref<1x32xf32, #tpu.memory_space<vmem>>, vector<1x32xf32>
    %4 = vector.broadcast %3 : vector<1x32xf32> to vector<64x32xf32>
    %5 = arith.addf %2, %4 : vector<64x32xf32>
    %cst_5 = arith.constant 0.000000e+00 : f32
    %6 = vector.broadcast %cst_5 : f32 to vector<64x32xf32>
    %7 = arith.maximumf %5, %6 : vector<64x32xf32>
    %cst_6 = arith.constant 1.000000e-01 : f32
    %8 = vector.broadcast %cst_6 : f32 to vector<64x32xf32>
    %9 = arith.mulf %8, %7 : vector<64x32xf32>
    %c0_7 = arith.constant 0 : index
    %c0_8 = arith.constant 0 : index
    %10 = vector.load %arg0[%c0_7, %c0_8] : memref<64x64xbf16, #tpu.memory_space<vmem>>, vector<64x64xbf16>
    %11 = arith.truncf %7 : vector<64x32xf32> to vector<64x32xbf16>
    %cst_9 = arith.constant dense<0.000000e+00> : vector<64x32xf32>
    %12 = tpu.matmul %10, %11, %cst_9 {dimension_numbers = #tpu.dot_dimension_numbers<[1], [0], [0], [1], [0, 0, 1, 1], [], []>} : vector<64x64xbf16>, vector<64x32xbf16>, vector<64x32xf32> -> vector<64x32xf32>
    %13 = arith.addf %12, %9 : vector<64x32xf32>
    %14 = arith.truncf %13 : vector<64x32xf32> to vector<64x32xbf16>
    %c0_10 = arith.constant 0 : index
    %c0_11 = arith.constant 0 : index
    %c0_12 = arith.constant 0 : index
    %15 = vector.load %arg4[%c0_10, %c0_11, %c0_12] : memref<2x32x32xbf16, #tpu.memory_space<vmem>>, vector<1x32x32xbf16>
    %16 = vector.shape_cast %15 : vector<1x32x32xbf16> to vector<32x32xbf16>
    %cst_13 = arith.constant dense<0.000000e+00> : vector<64x32xf32>
    %17 = tpu.matmul %14, %16, %cst_13 {dimension_numbers = #tpu.dot_dimension_numbers<[1], [0], [0], [1], [0, 0, 1, 1], [], []>} : vector<64x32xbf16>, vector<32x32xbf16>, vector<64x32xf32> -> vector<64x32xf32>
    %c0_14 = arith.constant 0 : index
    %c0_15 = arith.constant 0 : index
    %c0_16 = arith.constant 0 : index
    %18 = vector.load %arg5[%c0_14, %c0_15, %c0_16] : memref<2x1x32xf32, #tpu.memory_space<vmem>>, vector<1x1x32xf32>
    %19 = vector.shape_cast %18 : vector<1x1x32xf32> to vector<1x32xf32>
    %20 = vector.broadcast %19 : vector<1x32xf32> to vector<64x32xf32>
    %21 = arith.addf %17, %20 : vector<64x32xf32>
    %cst_17 = arith.constant 0.000000e+00 : f32
    %22 = vector.broadcast %cst_17 : f32 to vector<64x32xf32>
    %23 = arith.maximumf %21, %22 : vector<64x32xf32>
    %24 = arith.truncf %23 : vector<64x32xf32> to vector<64x32xbf16>
    %cst_18 = arith.constant dense<0.000000e+00> : vector<64x32xf32>
    %25 = tpu.matmul %10, %24, %cst_18 {dimension_numbers = #tpu.dot_dimension_numbers<[1], [0], [0], [1], [0, 0, 1, 1], [], []>} : vector<64x64xbf16>, vector<64x32xbf16>, vector<64x32xf32> -> vector<64x32xf32>
    %26 = arith.addf %25, %9 : vector<64x32xf32>
    %27 = arith.truncf %26 : vector<64x32xf32> to vector<64x32xbf16>
    %c1 = arith.constant 1 : index
    %c0_19 = arith.constant 0 : index
    %c0_20 = arith.constant 0 : index
    %28 = vector.load %arg4[%c1, %c0_19, %c0_20] : memref<2x32x32xbf16, #tpu.memory_space<vmem>>, vector<1x32x32xbf16>
    %29 = vector.shape_cast %28 : vector<1x32x32xbf16> to vector<32x32xbf16>
    %cst_21 = arith.constant dense<0.000000e+00> : vector<64x32xf32>
    %30 = tpu.matmul %27, %29, %cst_21 {dimension_numbers = #tpu.dot_dimension_numbers<[1], [0], [0], [1], [0, 0, 1, 1], [], []>} : vector<64x32xbf16>, vector<32x32xbf16>, vector<64x32xf32> -> vector<64x32xf32>
    %c1_22 = arith.constant 1 : index
    %c0_23 = arith.constant 0 : index
    %c0_24 = arith.constant 0 : index
    %31 = vector.load %arg5[%c1_22, %c0_23, %c0_24] : memref<2x1x32xf32, #tpu.memory_space<vmem>>, vector<1x1x32xf32>
    %32 = vector.shape_cast %31 : vector<1x1x32xf32> to vector<1x32xf32>
    %33 = vector.broadcast %32 : vector<1x32xf32> to vector<64x32xf32>
    %34 = arith.addf %30, %33 : vector<64x32xf32>
    %cst_25 = arith.constant 0.000000e+00 : f32
    %35 = vector.broadcast %cst_25 : f32 to vector<64x32xf32>
    %36 = arith.maximumf %34, %35 : vector<64x32xf32>
    %37 = arith.truncf %36 : vector<64x32xf32> to vector<64x32xbf16>
    %c0_26 = arith.constant 0 : index
    %c0_27 = arith.constant 0 : index
    %38 = vector.load %arg6[%c0_26, %c0_27] : memref<32x8xbf16, #tpu.memory_space<vmem>>, vector<32x8xbf16>
    %cst_28 = arith.constant dense<0.000000e+00> : vector<64x8xf32>
    %39 = tpu.matmul %37, %38, %cst_28 {dimension_numbers = #tpu.dot_dimension_numbers<[1], [0], [0], [1], [0, 0, 1, 1], [], []>} : vector<64x32xbf16>, vector<32x8xbf16>, vector<64x8xf32> -> vector<64x8xf32>
    %c0_29 = arith.constant 0 : index
    %c0_30 = arith.constant 0 : index
    %40 = vector.load %arg7[%c0_29, %c0_30] : memref<1x8xf32, #tpu.memory_space<vmem>>, vector<1x8xf32>
    %41 = vector.broadcast %40 : vector<1x8xf32> to vector<64x8xf32>
    %42 = arith.addf %39, %41 : vector<64x8xf32>
    %c0_31 = arith.constant 0 : index
    %c0_32 = arith.constant 0 : index
    %43 = vector.load %arg8[%c0_31, %c0_32] : memref<64x8xf32, #tpu.memory_space<vmem>>, vector<64x8xf32>
    tpu.vector_store %arg8[%c0_31, %c0_32], %42 {strides = array<i32>} : memref<64x8xf32, #tpu.memory_space<vmem>>, vector<64x8xf32>,
    return
  }
}

</mosaic_0001>

<llo_original>
// kernel: tpu_custom_call.1
$region0: #{tpu_custom_call.1}
  #allocation0 [shape = 'u32[]', space=smem, size = 0x4, offset = 0x4, fixed_abs, tag = 'smem constant byte address 0x4 - core index']
  #allocation1 [shape = 'u32[144,128]{1,0:T(1,128)}', space=vmem, size = 0x12000, scoped, tag = 'internal scratch']
  %s0 = inlined_call_operand.vmem [shape: bf16[64,64], index: 0, kind: input, shape index: {}]
  %s1 = inlined_call_operand.vmem [shape: bf16[64,16], index: 1, kind: input, shape index: {}]
  %s2 = inlined_call_operand.hbm [shape: bf16[16,32], index: 2, kind: input, shape index: {}]
  %s3 = inlined_call_operand.vmem [shape: f32[1,32], index: 3, kind: input, shape index: {}]
  %s4 = inlined_call_operand.vmem [shape: bf16[2,32,32], index: 4, kind: input, shape index: {}]
  %s5 = inlined_call_operand.vmem [shape: f32[2,1,32], index: 5, kind: input, shape index: {}]
  %s6 = inlined_call_operand.vmem [shape: bf16[32,8], index: 6, kind: input, shape index: {}]
  %s7 = inlined_call_operand.vmem [shape: f32[1,8], index: 7, kind: input, shape index: {}]
  %s8 = inlined_call_operand.vmem [shape: f32[64,8], index: 8, kind: output, shape index: {}]
  %s9 = sld [smem:[#allocation0]]
  $region46: #{tpu_custom_call.1} parent=0
    _
  %s11 = ssub.s32 1, %s9
  %s12 = scalar_select 0, %s11, %s9
  $region1: #{tpu_custom_call.1} parent=0
    #allocation2 [shape = 'u8[4096]{0}', space=vmem, size = 0x1000, scoped, tag = 'input window, operand 2, single buffered']
    #allocation3 [shape = 's32[1]{0}', space=sflag, size = 0x4, scoped, tag = 'scoped memory for tpu_custom_call.1']
    %13 = vsyncpa [#allocation3], 0
    // Predicated region
    $region2: #{tpu_custom_call.1} parent=1 // pred_check
      _
    $region3: #{tpu_custom_call.1} parent=1 // pred_check_branch
      %15 = sbr.rel (0) target = $region5
    $region4: #{tpu_custom_call.1} parent=1 // pred_region
      _
    $region5: #{tpu_custom_call.1} parent=1 // pred_fallthru
      _
    // Predicated region
    $region6: #{tpu_custom_call.1} parent=1 // pred_check
      _
    $region7: #{tpu_custom_call.1} parent=1 // pred_check_branch
      %17 = sbr.rel (0) target = $region9
    $region8: #{tpu_custom_call.1} parent=1 // pred_region
      _
    $region9: #{tpu_custom_call.1} parent=1 // pred_fallthru
      _
    // Predicated region
    $region10: #{tpu_custom_call.1} parent=1 // pred_check
      _
    $region11: #{tpu_custom_call.1} parent=1 // pred_check_branch
      %19 = sbr.rel (0) target = $region13
    $region12: #{tpu_custom_call.1} parent=1 // pred_region
      %s21 = ssub.s32 128, 128
      %22 = vsyncadd [#allocation3], %s21
      %s23 = sshll.u32 [#allocation2], 4
      %s24 = int_to_ptr.vmem [resolvable:$true] %s23
      %29 = dma.hbm_to_vmem [thread:$0]  %s2, 128, %s24, [#allocation3], 64, 64, 4
    $region13: #{tpu_custom_call.1} parent=1 // pred_fallthru
      _
    // Predicated region
    $region14: #{tpu_custom_call.1} parent=1 // pred_check
      _
    $region15: #{tpu_custom_call.1} parent=1 // pred_check_branch
      %31 = sbr.rel (0) target = $region17
    $region16: #{tpu_custom_call.1} parent=1 // pred_region
      _
    $region17: #{tpu_custom_call.1} parent=1 // pred_fallthru
      _
    // Predicated region
    $region18: #{tpu_custom_call.1} parent=1 // pred_check
      _
    $region19: #{tpu_custom_call.1} parent=1 // pred_check_branch
      %33 = sbr.rel (0) target = $region21
    $region20: #{tpu_custom_call.1} parent=1 // pred_region
      _
    $region21: #{tpu_custom_call.1} parent=1 // pred_fallthru
      _
    // Predicated region
    $region22: #{tpu_custom_call.1} parent=1 // pred_check
      _
    $region23: #{tpu_custom_call.1} parent=1 // pred_check_branch
      %35 = sbr.rel (0) target = $region25
    $region24: #{tpu_custom_call.1} parent=1 // pred_region
      _
    $region25: #{tpu_custom_call.1} parent=1 // pred_fallthru
      _
    // Predicated region
    $region26: #{tpu_custom_call.1} parent=1 // pred_check
      _
    $region27: #{tpu_custom_call.1} parent=1 // pred_check_branch
      %37 = sbr.rel (0) target = $region29
    $region28: #{tpu_custom_call.1} parent=1 // pred_region
      _
    $region29: #{tpu_custom_call.1} parent=1 // pred_fallthru
      _
    // Predicated region
    $region30: #{tpu_custom_call.1} parent=1 // pred_check
      _
    $region31: #{tpu_custom_call.1} parent=1 // pred_check_branch
      %39 = sbr.rel (0) target = $region33
    $region32: #{tpu_custom_call.1} parent=1 // pred_region
      _
    $region33: #{tpu_custom_call.1} parent=1 // pred_fallthru
      _
    // Predicated region
    $region34: #{tpu_custom_call.1} parent=1 // pred_check
      _
    $region35: #{tpu_custom_call.1} parent=1 // pred_check_branch
      %41 = sbr.rel (0) target = $region37
    $region36: #{tpu_custom_call.1} parent=1 // pred_region
      %42 = dma.done [#allocation3], 128
    $region37: #{tpu_custom_call.1} parent=1 // pred_fallthru
      _
    %v44 = vld [vmem:[%s1] sm:$0xf]
    %v45 = vld [vmem:[%s1 + $0x4] sm:$0xf]
    %v46 = vld [vmem:[%s1 + $0x8] sm:$0xf]
    %v47 = vld [vmem:[%s1 + $0xc] sm:$0xf]
    %v48 = vld [vmem:[%s1 + $0x10] sm:$0xf]
    %v49 = vld [vmem:[%s1 + $0x14] sm:$0xf]
    %v50 = vld [vmem:[%s1 + $0x18] sm:$0xf]
    %v51 = vld [vmem:[%s1 + $0x1c] sm:$0xf]
    %v52 = vld [vmem:[#allocation2] sm:$0xf]
    %v53 = vld [vmem:[#allocation2 + $0x4] sm:$0xf]
    %v54 = vld [vmem:[%s3] sm:$0x1]
    %v56 = vlaneseq
    %v57 = vshrl.u32 %v56, 7
    %v58 = vsub.s32 0, %v57
    %v59 = vrot.slane %v54, %v58
    %v69 = vunpack.c.l.b16 %v44
    %v70 = vunpack.c.l.b16 %v45
    %v71 = vunpack.c.l.b16 %v46
    %v72 = vunpack.c.l.b16 %v47
    %v73 = vunpack.c.l.b16 %v48
    %v74 = vunpack.c.l.b16 %v49
    %v75 = vunpack.c.l.b16 %v50
    %v76 = vunpack.c.l.b16 %v51
    %v77 = vpack.c.b16 %v70, %v69
    %v78 = vpack.c.b16 %v72, %v71
    %v79 = vpack.c.b16 %v74, %v73
    %v80 = vpack.c.b16 %v76, %v75
    %v83 = vunpack.c.l.b16 %v52
    %v84 = vunpack.c.l.b16 %v53
    %v85 = vpack.c.b16 %v84, %v83
    %vm87 = vcmask 130048
    %v89 = vsel %vm87, %v77, 0
    %v92 = vsel %vm87, %v78, 0
    %v95 = vsel %vm87, %v79, 0
    %v98 = vsel %vm87, %v80, 0
    %100 = vmatprep.subr.bf16.mxu0 0
    %101 = vmatpush1.bf16.msra.mxu0 %v85
    %102 = vmatprep.subr.bf16.mxu0 0
    %103 = vmatpush1.bf16.msra.mxu0 0
    %104 = vmatprep.subr.bf16.mxu0 0
    %105 = vmatpush1.bf16.msra.mxu0 0
    %106 = vmatprep.subr.bf16.mxu0 0
    %107 = vmatpush1.bf16.msra.mxu0 0
    %108 = vmatprep.subr.bf16.mxu0 0
    %109 = vmatpush1.bf16.msra.mxu0 0
    %110 = vmatprep.subr.bf16.mxu0 0
    %111 = vmatpush1.bf16.msra.mxu0 0
    %112 = vmatprep.subr.bf16.mxu0 0
    %113 = vmatpush1.bf16.msra.mxu0 0
    %114 = vmatprep.subr.bf16.mxu0 0
    %115 = vmatpush1.bf16.msra.mxu0 0
    %116 = vmatprep.subr.bf16.mxu0 0
    %117 = vmatpush1.bf16.msra.mxu0 0
    %118 = vmatprep.subr.bf16.mxu0 0
    %119 = vmatpush1.bf16.msra.mxu0 0
    %120 = vmatprep.subr.bf16.mxu0 0
    %121 = vmatpush1.bf16.msra.mxu0 0
    %122 = vmatprep.subr.bf16.mxu0 0
    %123 = vmatpush1.bf16.msra.mxu0 0
    %124 = vmatprep.subr.bf16.mxu0 0
    %125 = vmatpush1.bf16.msra.mxu0 0
    %126 = vmatprep.subr.bf16.mxu0 0
    %127 = vmatpush1.bf16.msra.mxu0 0
    %128 = vmatprep.subr.bf16.mxu0 0
    %129 = vmatpush1.bf16.msra.mxu0 0
    %130 = vmatprep.subr.bf16.mxu0 0
    %131 = vmatpush1.bf16.msra.mxu0 0
    %132 = vmatprep.mubr.bf16.mxu0 0
    %133 = vmatmul.mubr.bf16.gmra.mrb[0].mxu0 %v89
    %v134 = vpop.f32.mrb[0].mxu0
    %v135 = vadd.f32 %v59, %v134
    %v136 = vpop.f32.mrb[0].mxu0
    %v137 = vpop.f32.mrb[0].mxu0
    %v138 = vadd.f32 %v59, %v137
    %v139 = vpop.f32.mrb[0].mxu0
    %140 = vmatprep.mubr.bf16.mxu0 0
    %141 = vmatmul.mubr.bf16.gmra.mrb[0].mxu0 %v92
    %v142 = vpop.f32.mrb[0].mxu0
    %v143 = vadd.f32 %v59, %v142
    %v144 = vpop.f32.mrb[0].mxu0
    %v145 = vpop.f32.mrb[0].mxu0
    %v146 = vadd.f32 %v59, %v145
    %v147 = vpop.f32.mrb[0].mxu0
    %148 = vmatprep.mubr.bf16.mxu0 0
    %149 = vmatmul.mubr.bf16.gmra.mrb[0].mxu0 %v95
    %v150 = vpop.f32.mrb[0].mxu0
    %v151 = vadd.f32 %v59, %v150
    %v152 = vpop.f32.mrb[0].mxu0
    %v153 = vpop.f32.mrb[0].mxu0
    %v154 = vadd.f32 %v59, %v153
    %v155 = vpop.f32.mrb[0].mxu0
    %156 = vmatprep.mubr.bf16.mxu0 0
    %157 = vmatmul.mubr.bf16.gmra.mrb[0].mxu0 %v98
    %v158 = vpop.f32.mrb[0].mxu0
    %v159 = vadd.f32 %v59, %v158
    %v160 = vpop.f32.mrb[0].mxu0
    %v161 = vpop.f32.mrb[0].mxu0
    %v162 = vadd.f32 %v59, %v161
    %v163 = vpop.f32.mrb[0].mxu0
    %164 = vdwg.mxu0
    %v165 = vmax.f32 %v135, 0.0
    %v166 = vmax.f32 %v138, 0.0
    %v167 = vmax.f32 %v143, 0.0
    %v168 = vmax.f32 %v146, 0.0
    %v169 = vmax.f32 %v151, 0.0
    %v170 = vmax.f32 %v154, 0.0
    %v171 = vmax.f32 %v159, 0.0
    %v172 = vmax.f32 %v162, 0.0
    %v173 = vmul.f32 %v165, 0.1
    %v174 = vmul.f32 %v166, 0.1
    %v175 = vmul.f32 %v167, 0.1
    %v176 = vmul.f32 %v168, 0.1
    %v177 = vmul.f32 %v169, 0.1
    %v178 = vmul.f32 %v170, 0.1
    %v179 = vmul.f32 %v171, 0.1
    %v180 = vmul.f32 %v172, 0.1
    %v181 = vld [vmem:[%s0] sm:$0xf]
    %v182 = vld [vmem:[%s0 + $0x4] sm:$0xf]
    %v183 = vld [vmem:[%s0 + $0x8] sm:$0xf]
    %v184 = vld [vmem:[%s0 + $0xc] sm:$0xf]
    %v185 = vld [vmem:[%s0 + $0x10] sm:$0xf]
    %v186 = vld [vmem:[%s0 + $0x14] sm:$0xf]
    %v187 = vld [vmem:[%s0 + $0x18] sm:$0xf]
    %v188 = vld [vmem:[%s0 + $0x1c] sm:$0xf]
    %v189 = vpack.c.bf16 %v166, %v165
    %v190 = vpack.c.bf16 %v168, %v167
    %v191 = vpack.c.bf16 %v170, %v169
    %v192 = vpack.c.bf16 %v172, %v171
    %v201 = vunpack.c.l.b16 %v181
    %v202 = vunpack.c.l.b16 %v182
    %v203 = vunpack.c.l.b16 %v183
    %v204 = vunpack.c.l.b16 %v184
    %v205 = vunpack.c.l.b16 %v185
    %v206 = vunpack.c.l.b16 %v186
    %v207 = vunpack.c.l.b16 %v187
    %v208 = vunpack.c.l.b16 %v188
    %v209 = vpack.c.b16 %v202, %v201
    %v210 = vpack.c.b16 %v204, %v203
    %v211 = vpack.c.b16 %v206, %v205
    %v212 = vpack.c.b16 %v208, %v207
    %vm213 = vcmask 523264
    %v215 = vsel %vm213, %v209, 0
    %v218 = vsel %vm213, %v210, 0
    %v221 = vsel %vm213, %v211, 0
    %v224 = vsel %vm213, %v212, 0
    %226 = vmatprep.subr.bf16.mxu0 0
    %227 = vmatpush1.bf16.msra.mxu0 %v189
    %228 = vmatprep.subr.bf16.mxu0 0
    %229 = vmatpush1.bf16.msra.mxu0 %v190
    %230 = vmatprep.subr.bf16.mxu0 0
    %231 = vmatpush1.bf16.msra.mxu0 %v191
    %232 = vmatprep.subr.bf16.mxu0 0
    %233 = vmatpush1.bf16.msra.mxu0 %v192
    %234 = vmatprep.subr.bf16.mxu0 0
    %235 = vmatpush1.bf16.msra.mxu0 0
    %236 = vmatprep.subr.bf16.mxu0 0
    %237 = vmatpush1.bf16.msra.mxu0 0
    %238 = vmatprep.subr.bf16.mxu0 0
    %239 = vmatpush1.bf16.msra.mxu0 0
    %240 = vmatprep.subr.bf16.mxu0 0
    %241 = vmatpush1.bf16.msra.mxu0 0
    %242 = vmatprep.subr.bf16.mxu0 0
    %243 = vmatpush1.bf16.msra.mxu0 0
    %244 = vmatprep.subr.bf16.mxu0 0
    %245 = vmatpush1.bf16.msra.mxu0 0
    %246 = vmatprep.subr.bf16.mxu0 0
    %247 = vmatpush1.bf16.msra.mxu0 0
    %248 = vmatprep.subr.bf16.mxu0 0
    %249 = vmatpush1.bf16.msra.mxu0 0
    %250 = vmatprep.subr.bf16.mxu0 0
    %251 = vmatpush1.bf16.msra.mxu0 0
    %252 = vmatprep.subr.bf16.mxu0 0
    %253 = vmatpush1.bf16.msra.mxu0 0
    %254 = vmatprep.subr.bf16.mxu0 0
    %255 = vmatpush1.bf16.msra.mxu0 0
    %256 = vmatprep.subr.bf16.mxu0 0
    %257 = vmatpush1.bf16.msra.mxu0 0
    %258 = vmatprep.mubr.bf16.mxu0 0
    %259 = vmatmul.mubr.bf16.gmra.mrb[0].mxu0 %v215
    %v260 = vpop.f32.mrb[0].mxu0
    %v261 = vadd.f32 %v173, %v260
    %v262 = vpop.f32.mrb[0].mxu0
    %v263 = vpop.f32.mrb[0].mxu0
    %v264 = vadd.f32 %v174, %v263
    %v265 = vpop.f32.mrb[0].mxu0
    %266 = vmatprep.mubr.bf16.mxu0 0
    %267 = vmatmul.mubr.bf16.gmra.mrb[0].mxu0 %v218
    %v268 = vpop.f32.mrb[0].mxu0
    %v269 = vadd.f32 %v175, %v268
    %v270 = vpop.f32.mrb[0].mxu0
    %v271 = vpop.f32.mrb[0].mxu0
    %v272 = vadd.f32 %v176, %v271
    %v273 = vpop.f32.mrb[0].mxu0
    %274 = vmatprep.mubr.bf16.mxu0 0
    %275 = vmatmul.mubr.bf16.gmra.mrb[0].mxu0 %v221
    %v276 = vpop.f32.mrb[0].mxu0
    %v277 = vadd.f32 %v177, %v276
    %v278 = vpop.f32.mrb[0].mxu0
    %v279 = vpop.f32.mrb[0].mxu0
    %v280 = vadd.f32 %v178, %v279
    %v281 = vpop.f32.mrb[0].mxu0
    %282 = vmatprep.mubr.bf16.mxu0 0
    %283 = vmatmul.mubr.bf16.gmra.mrb[0].mxu0 %v224
    %v284 = vpop.f32.mrb[0].mxu0
    %v285 = vadd.f32 %v179, %v284
    %v286 = vpop.f32.mrb[0].mxu0
    %v287 = vpop.f32.mrb[0].mxu0
    %v288 = vadd.f32 %v180, %v287
    %v289 = vpop.f32.mrb[0].mxu0
    %290 = vdwg.mxu0
    %v291 = vpack.c.bf16 %v264, %v261
    %v292 = vpack.c.bf16 %v272, %v269
    %v293 = vpack.c.bf16 %v280, %v277
    %v294 = vpack.c.bf16 %v288, %v285
    %v295 = vld [vmem:[%s4] sm:$0xf]
    %v296 = vld [vmem:[%s4 + $0x4] sm:$0xf]
    %v297 = vld [vmem:[%s4 + $0x8] sm:$0xf]
    %v298 = vld [vmem:[%s4 + $0xc] sm:$0xf]
    %v299 = vld [vmem:[%s5] sm:$0x1]
    %v301 = vlaneseq
    %v302 = vshrl.u32 %v301, 7
    %v303 = vsub.s32 0, %v302
    %v304 = vrot.slane %v299, %v303
    %v310 = vunpack.c.l.b16 %v295
    %v311 = vunpack.c.l.b16 %v296
    %v312 = vunpack.c.l.b16 %v297
    %v313 = vunpack.c.l.b16 %v298
    %v314 = vpack.c.b16 %v311, %v310
    %v315 = vpack.c.b16 %v313, %v312
    %vm318 = vcmask 261120
    %v320 = vsel %vm318, %v291, 0
    %v323 = vsel %vm318, %v292, 0
    %v326 = vsel %vm318, %v293, 0
    %v329 = vsel %vm318, %v294, 0
    %331 = vmatprep.subr.bf16.mxu0 0
    %332 = vmatpush1.bf16.msra.mxu0 %v314
    %333 = vmatprep.subr.bf16.mxu0 0
    %334 = vmatpush1.bf16.msra.mxu0 %v315
    %335 = vmatprep.subr.bf16.mxu0 0
    %336 = vmatpush1.bf16.msra.mxu0 0
    %337 = vmatprep.subr.bf16.mxu0 0
    %338 = vmatpush1.bf16.msra.mxu0 0
    %339 = vmatprep.subr.bf16.mxu0 0
    %340 = vmatpush1.bf16.msra.mxu0 0
    %341 = vmatprep.subr.bf16.mxu0 0
    %342 = vmatpush1.bf16.msra.mxu0 0
    %343 = vmatprep.subr.bf16.mxu0 0
    %344 = vmatpush1.bf16.msra.mxu0 0
    %345 = vmatprep.subr.bf16.mxu0 0
    %346 = vmatpush1.bf16.msra.mxu0 0
    %347 = vmatprep.subr.bf16.mxu0 0
    %348 = vmatpush1.bf16.msra.mxu0 0
    %349 = vmatprep.subr.bf16.mxu0 0
    %350 = vmatpush1.bf16.msra.mxu0 0
    %351 = vmatprep.subr.bf16.mxu0 0
    %352 = vmatpush1.bf16.msra.mxu0 0
    %353 = vmatprep.subr.bf16.mxu0 0
    %354 = vmatpush1.bf16.msra.mxu0 0
    %355 = vmatprep.subr.bf16.mxu0 0
    %356 = vmatpush1.bf16.msra.mxu0 0
    %357 = vmatprep.subr.bf16.mxu0 0
    %358 = vmatpush1.bf16.msra.mxu0 0
    %359 = vmatprep.subr.bf16.mxu0 0
    %360 = vmatpush1.bf16.msra.mxu0 0
    %361 = vmatprep.subr.bf16.mxu0 0
    %362 = vmatpush1.bf16.msra.mxu0 0
    %363 = vmatprep.mubr.bf16.mxu0 0
    %364 = vmatmul.mubr.bf16.gmra.mrb[0].mxu0 %v320
    %v365 = vpop.f32.mrb[0].mxu0
    %v366 = vadd.f32 %v304, %v365
    %v367 = vpop.f32.mrb[0].mxu0
    %v368 = vpop.f32.mrb[0].mxu0
    %v369 = vadd.f32 %v304, %v368
    %v370 = vpop.f32.mrb[0].mxu0
    %371 = vmatprep.mubr.bf16.mxu0 0
    %372 = vmatmul.mubr.bf16.gmra.mrb[0].mxu0 %v323
    %v373 = vpop.f32.mrb[0].mxu0
    %v374 = vadd.f32 %v304, %v373
    %v375 = vpop.f32.mrb[0].mxu0
    %v376 = vpop.f32.mrb[0].mxu0
    %v377 = vadd.f32 %v304, %v376
    %v378 = vpop.f32.mrb[0].mxu0
    %379 = vmatprep.mubr.bf16.mxu0 0
    %380 = vmatmul.mubr.bf16.gmra.mrb[0].mxu0 %v326
    %v381 = vpop.f32.mrb[0].mxu0
    %v382 = vadd.f32 %v304, %v381
    %v383 = vpop.f32.mrb[0].mxu0
    %v384 = vpop.f32.mrb[0].mxu0
    %v385 = vadd.f32 %v304, %v384
    %v386 = vpop.f32.mrb[0].mxu0
    %387 = vmatprep.mubr.bf16.mxu0 0
    %388 = vmatmul.mubr.bf16.gmra.mrb[0].mxu0 %v329
    %v389 = vpop.f32.mrb[0].mxu0
    %v390 = vadd.f32 %v304, %v389
    %v391 = vpop.f32.mrb[0].mxu0
    %v392 = vpop.f32.mrb[0].mxu0
    %v393 = vadd.f32 %v304, %v392
    %v394 = vpop.f32.mrb[0].mxu0
    %395 = vdwg.mxu0
    %v396 = vmax.f32 %v366, 0.0
    %v397 = vmax.f32 %v369, 0.0
    %v398 = vmax.f32 %v374, 0.0
    %v399 = vmax.f32 %v377, 0.0
    %v400 = vmax.f32 %v382, 0.0
    %v401 = vmax.f32 %v385, 0.0
    %v402 = vmax.f32 %v390, 0.0
    %v403 = vmax.f32 %v393, 0.0
    %v404 = vpack.c.bf16 %v397, %v396
    %v405 = vpack.c.bf16 %v399, %v398
    %v406 = vpack.c.bf16 %v401, %v400
    %v407 = vpack.c.bf16 %v403, %v402
    %408 = vmatprep.subr.bf16.mxu0 0
    %409 = vmatpush1.bf16.msra.mxu0 %v404
    %410 = vmatprep.subr.bf16.mxu0 0
    %411 = vmatpush1.bf16.msra.mxu0 %v405
    %412 = vmatprep.subr.bf16.mxu0 0
    %413 = vmatpush1.bf16.msra.mxu0 %v406
    %414 = vmatprep.subr.bf16.mxu0 0
    %415 = vmatpush1.bf16.msra.mxu0 %v407
    %416 = vmatprep.subr.bf16.mxu0 0
    %417 = vmatpush1.bf16.msra.mxu0 0
    %418 = vmatprep.subr.bf16.mxu0 0
    %419 = vmatpush1.bf16.msra.mxu0 0
    %420 = vmatprep.subr.bf16.mxu0 0
    %421 = vmatpush1.bf16.msra.mxu0 0
    %422 = vmatprep.subr.bf16.mxu0 0
    %423 = vmatpush1.bf16.msra.mxu0 0
    %424 = vmatprep.subr.bf16.mxu0 0
    %425 = vmatpush1.bf16.msra.mxu0 0
    %426 = vmatprep.subr.bf16.mxu0 0
    %427 = vmatpush1.bf16.msra.mxu0 0
    %428 = vmatprep.subr.bf16.mxu0 0
    %429 = vmatpush1.bf16.msra.mxu0 0
    %430 = vmatprep.subr.bf16.mxu0 0
    %431 = vmatpush1.bf16.msra.mxu0 0
    %432 = vmatprep.subr.bf16.mxu0 0
    %433 = vmatpush1.bf16.msra.mxu0 0
    %434 = vmatprep.subr.bf16.mxu0 0
    %435 = vmatpush1.bf16.msra.mxu0 0
    %436 = vmatprep.subr.bf16.mxu0 0
    %437 = vmatpush1.bf16.msra.mxu0 0
    %438 = vmatprep.subr.bf16.mxu0 0
    %439 = vmatpush1.bf16.msra.mxu0 0
    %440 = vmatprep.mubr.bf16.mxu0 0
    %441 = vmatmul.mubr.bf16.gmra.mrb[0].mxu0 %v215
    %v442 = vpop.f32.mrb[0].mxu0
    %v443 = vadd.f32 %v173, %v442
    %v444 = vpop.f32.mrb[0].mxu0
    %v445 = vpop.f32.mrb[0].mxu0
    %v446 = vadd.f32 %v174, %v445
    %v447 = vpop.f32.mrb[0].mxu0
    %448 = vmatprep.mubr.bf16.mxu0 0
    %449 = vmatmul.mubr.bf16.gmra.mrb[0].mxu0 %v218
    %v450 = vpop.f32.mrb[0].mxu0
    %v451 = vadd.f32 %v175, %v450
    %v452 = vpop.f32.mrb[0].mxu0
    %v453 = vpop.f32.mrb[0].mxu0
    %v454 = vadd.f32 %v176, %v453
    %v455 = vpop.f32.mrb[0].mxu0
    %456 = vmatprep.mubr.bf16.mxu0 0
    %457 = vmatmul.mubr.bf16.gmra.mrb[0].mxu0 %v221
    %v458 = vpop.f32.mrb[0].mxu0
    %v459 = vadd.f32 %v177, %v458
    %v460 = vpop.f32.mrb[0].mxu0
    %v461 = vpop.f32.mrb[0].mxu0
    %v462 = vadd.f32 %v178, %v461
    %v463 = vpop.f32.mrb[0].mxu0
    %464 = vmatprep.mubr.bf16.mxu0 0
    %465 = vmatmul.mubr.bf16.gmra.mrb[0].mxu0 %v224
    %v466 = vpop.f32.mrb[0].mxu0
    %v467 = vadd.f32 %v179, %v466
    %v468 = vpop.f32.mrb[0].mxu0
    %v469 = vpop.f32.mrb[0].mxu0
    %v470 = vadd.f32 %v180, %v469
    %v471 = vpop.f32.mrb[0].mxu0
    %472 = vdwg.mxu0
    %v473 = vpack.c.bf16 %v446, %v443
    %v474 = vpack.c.bf16 %v454, %v451
    %v475 = vpack.c.bf16 %v462, %v459
    %v476 = vpack.c.bf16 %v470, %v467
    %s477 = scalar_lea.vmem %s4, 16
    %v478 = vld [vmem:[%s477] sm:$0xf]
    %v479 = vld [vmem:[%s477 + $0x4] sm:$0xf]
    %v480 = vld [vmem:[%s477 + $0x8] sm:$0xf]
    %v481 = vld [vmem:[%s477 + $0xc] sm:$0xf]
    %s482 = scalar_lea.vmem %s5, 1
    %v483 = vld [vmem:[%s482] sm:$0x1]
    %v485 = vlaneseq
    %v486 = vshrl.u32 %v485, 7
    %v487 = vsub.s32 0, %v486
    %v488 = vrot.slane %v483, %v487
    %v494 = vunpack.c.l.b16 %v478
    %v495 = vunpack.c.l.b16 %v479
    %v496 = vunpack.c.l.b16 %v480
    %v497 = vunpack.c.l.b16 %v481
    %v498 = vpack.c.b16 %v495, %v494
    %v499 = vpack.c.b16 %v497, %v496
    %v503 = vsel %vm318, %v473, 0
    %v506 = vsel %vm318, %v474, 0
    %v509 = vsel %vm318, %v475, 0
    %v512 = vsel %vm318, %v476, 0
    %514 = vmatprep.subr.bf16.mxu0 0
    %515 = vmatpush1.bf16.msra.mxu0 %v498
    %516 = vmatprep.subr.bf16.mxu0 0
    %517 = vmatpush1.bf16.msra.mxu0 %v499
    %518 = vmatprep.subr.bf16.mxu0 0
    %519 = vmatpush1.bf16.msra.mxu0 0
    %520 = vmatprep.subr.bf16.mxu0 0
    %521 = vmatpush1.bf16.msra.mxu0 0
    %522 = vmatprep.subr.bf16.mxu0 0
    %523 = vmatpush1.bf16.msra.mxu0 0
    %524 = vmatprep.subr.bf16.mxu0 0
    %525 = vmatpush1.bf16.msra.mxu0 0
    %526 = vmatprep.subr.bf16.mxu0 0
    %527 = vmatpush1.bf16.msra.mxu0 0
    %528 = vmatprep.subr.bf16.mxu0 0
    %529 = vmatpush1.bf16.msra.mxu0 0
    %530 = vmatprep.subr.bf16.mxu0 0
    %531 = vmatpush1.bf16.msra.mxu0 0
    %532 = vmatprep.subr.bf16.mxu0 0
    %533 = vmatpush1.bf16.msra.mxu0 0
    %534 = vmatprep.subr.bf16.mxu0 0
    %535 = vmatpush1.bf16.msra.mxu0 0
    %536 = vmatprep.subr.bf16.mxu0 0
    %537 = vmatpush1.bf16.msra.mxu0 0
    %538 = vmatprep.subr.bf16.mxu0 0
    %539 = vmatpush1.bf16.msra.mxu0 0
    %540 = vmatprep.subr.bf16.mxu0 0
    %541 = vmatpush1.bf16.msra.mxu0 0
    %542 = vmatprep.subr.bf16.mxu0 0
    %543 = vmatpush1.bf16.msra.mxu0 0
    %544 = vmatprep.subr.bf16.mxu0 0
    %545 = vmatpush1.bf16.msra.mxu0 0
    %546 = vmatprep.mubr.bf16.mxu0 0
    %547 = vmatmul.mubr.bf16.gmra.mrb[0].mxu0 %v503
    %v548 = vpop.f32.mrb[0].mxu0
    %v549 = vadd.f32 %v488, %v548
    %v550 = vpop.f32.mrb[0].mxu0
    %v551 = vpop.f32.mrb[0].mxu0
    %v552 = vadd.f32 %v488, %v551
    %v553 = vpop.f32.mrb[0].mxu0
    %554 = vmatprep.mubr.bf16.mxu0 0
    %555 = vmatmul.mubr.bf16.gmra.mrb[0].mxu0 %v506
    %v556 = vpop.f32.mrb[0].mxu0
    %v557 = vadd.f32 %v488, %v556
    %v558 = vpop.f32.mrb[0].mxu0
    %v559 = vpop.f32.mrb[0].mxu0
    %v560 = vadd.f32 %v488, %v559
    %v561 = vpop.f32.mrb[0].mxu0
    %562 = vmatprep.mubr.bf16.mxu0 0
    %563 = vmatmul.mubr.bf16.gmra.mrb[0].mxu0 %v509
    %v564 = vpop.f32.mrb[0].mxu0
    %v565 = vadd.f32 %v488, %v564
    %v566 = vpop.f32.mrb[0].mxu0
    %v567 = vpop.f32.mrb[0].mxu0
    %v568 = vadd.f32 %v488, %v567
    %v569 = vpop.f32.mrb[0].mxu0
    %570 = vmatprep.mubr.bf16.mxu0 0
    %571 = vmatmul.mubr.bf16.gmra.mrb[0].mxu0 %v512
    %v572 = vpop.f32.mrb[0].mxu0
    %v573 = vadd.f32 %v488, %v572
    %v574 = vpop.f32.mrb[0].mxu0
    %v575 = vpop.f32.mrb[0].mxu0
    %v576 = vadd.f32 %v488, %v575
    %v577 = vpop.f32.mrb[0].mxu0
    %578 = vdwg.mxu0
    %v579 = vmax.f32 %v549, 0.0
    %v580 = vmax.f32 %v552, 0.0
    %v581 = vmax.f32 %v557, 0.0
    %v582 = vmax.f32 %v560, 0.0
    %v583 = vmax.f32 %v565, 0.0
    %v584 = vmax.f32 %v568, 0.0
    %v585 = vmax.f32 %v573, 0.0
    %v586 = vmax.f32 %v576, 0.0
    %v587 = vpack.c.bf16 %v580, %v579
    %v588 = vpack.c.bf16 %v582, %v581
    %v589 = vpack.c.bf16 %v584, %v583
    %v590 = vpack.c.bf16 %v586, %v585
    %v591 = vld [vmem:[%s6] sm:$0xf]
    %v592 = vld [vmem:[%s6 + $0x4] sm:$0xf]
    %v593 = vld [vmem:[%s6 + $0x8] sm:$0xf]
    %v594 = vld [vmem:[%s6 + $0xc] sm:$0xf]
    %v595 = vld [vmem:[%s7] sm:$0x1]
    %v597 = vlaneseq
    %v598 = vshrl.u32 %v597, 7
    %v599 = vsub.s32 0, %v598
    %v600 = vrot.slane %v595, %v599
    %v606 = vunpack.c.l.b16 %v591
    %v607 = vunpack.c.l.b16 %v592
    %v608 = vunpack.c.l.b16 %v593
    %v609 = vunpack.c.l.b16 %v594
    %v610 = vpack.c.b16 %v607, %v606
    %v611 = vpack.c.b16 %v609, %v608
    %v615 = vsel %vm318, %v587, 0
    %v618 = vsel %vm318, %v588, 0
    %v621 = vsel %vm318, %v589, 0
    %v624 = vsel %vm318, %v590, 0
    %626 = vmatprep.subr.bf16.mxu0 0
    %627 = vmatpush1.bf16.msra.mxu0 %v610
    %628 = vmatprep.subr.bf16.mxu0 0
    %629 = vmatpush1.bf16.msra.mxu0 %v611
    %630 = vmatprep.subr.bf16.mxu0 0
    %631 = vmatpush1.bf16.msra.mxu0 0
    %632 = vmatprep.subr.bf16.mxu0 0
    %633 = vmatpush1.bf16.msra.mxu0 0
    %634 = vmatprep.subr.bf16.mxu0 0
    %635 = vmatpush1.bf16.msra.mxu0 0
    %636 = vmatprep.subr.bf16.mxu0 0
    %637 = vmatpush1.bf16.msra.mxu0 0
    %638 = vmatprep.subr.bf16.mxu0 0
    %639 = vmatpush1.bf16.msra.mxu0 0
    %640 = vmatprep.subr.bf16.mxu0 0
    %641 = vmatpush1.bf16.msra.mxu0 0
    %642 = vmatprep.subr.bf16.mxu0 0
    %643 = vmatpush1.bf16.msra.mxu0 0
    %644 = vmatprep.subr.bf16.mxu0 0
    %645 = vmatpush1.bf16.msra.mxu0 0
    %646 = vmatprep.subr.bf16.mxu0 0
    %647 = vmatpush1.bf16.msra.mxu0 0
    %648 = vmatprep.subr.bf16.mxu0 0
    %649 = vmatpush1.bf16.msra.mxu0 0
    %650 = vmatprep.subr.bf16.mxu0 0
    %651 = vmatpush1.bf16.msra.mxu0 0
    %652 = vmatprep.subr.bf16.mxu0 0
    %653 = vmatpush1.bf16.msra.mxu0 0
    %654 = vmatprep.subr.bf16.mxu0 0
    %655 = vmatpush1.bf16.msra.mxu0 0
    %656 = vmatprep.subr.bf16.mxu0 0
    %657 = vmatpush1.bf16.msra.mxu0 0
    %658 = vmatprep.mubr.bf16.mxu0 0
    %659 = vmatmul.mubr.bf16.gmra.mrb[0].mxu0 %v615
    %v660 = vpop.f32.mrb[0].mxu0
    %v661 = vadd.f32 %v600, %v660
    %v662 = vpop.f32.mrb[0].mxu0
    %v663 = vpop.f32.mrb[0].mxu0
    %v664 = vadd.f32 %v600, %v663
    %v665 = vpop.f32.mrb[0].mxu0
    %666 = vmatprep.mubr.bf16.mxu0 0
    %667 = vmatmul.mubr.bf16.gmra.mrb[0].mxu0 %v618
    %v668 = vpop.f32.mrb[0].mxu0
    %v669 = vadd.f32 %v600, %v668
    %v670 = vpop.f32.mrb[0].mxu0
    %v671 = vpop.f32.mrb[0].mxu0
    %v672 = vadd.f32 %v600, %v671
    %v673 = vpop.f32.mrb[0].mxu0
    %674 = vmatprep.mubr.bf16.mxu0 0
    %675 = vmatmul.mubr.bf16.gmra.mrb[0].mxu0 %v621
    %v676 = vpop.f32.mrb[0].mxu0
    %v677 = vadd.f32 %v600, %v676
    %v678 = vpop.f32.mrb[0].mxu0
    %v679 = vpop.f32.mrb[0].mxu0
    %v680 = vadd.f32 %v600, %v679
    %v681 = vpop.f32.mrb[0].mxu0
    %682 = vmatprep.mubr.bf16.mxu0 0
    %683 = vmatmul.mubr.bf16.gmra.mrb[0].mxu0 %v624
    %v684 = vpop.f32.mrb[0].mxu0
    %v685 = vadd.f32 %v600, %v684
    %v686 = vpop.f32.mrb[0].mxu0
    %v687 = vpop.f32.mrb[0].mxu0
    %v688 = vadd.f32 %v600, %v687
    %v689 = vpop.f32.mrb[0].mxu0
    %690 = vdwg.mxu0
    %vm691 = vcmask 64512
    %692 = vst.msk [vmem:[%s8] sm:$0xff] %vm691, %v661
    %693 = vst.msk [vmem:[%s8 + $0x8] sm:$0xff] %vm691, %v664
    %694 = vst.msk [vmem:[%s8 + $0x10] sm:$0xff] %vm691, %v669
    %695 = vst.msk [vmem:[%s8 + $0x18] sm:$0xff] %vm691, %v672
    %696 = vst.msk [vmem:[%s8 + $0x20] sm:$0xff] %vm691, %v677
    %697 = vst.msk [vmem:[%s8 + $0x28] sm:$0xff] %vm691, %v680
    %698 = vst.msk [vmem:[%s8 + $0x30] sm:$0xff] %vm691, %v685
    %699 = vst.msk [vmem:[%s8 + $0x38] sm:$0xff] %vm691, %v688
    // Predicated region
    $region38: #{tpu_custom_call.1} parent=1 // pred_check
      _
    $region39: #{tpu_custom_call.1} parent=1 // pred_check_branch
      %701 = sbr.rel (0) target = $region41
    $region40: #{tpu_custom_call.1} parent=1 // pred_region
      _
    $region41: #{tpu_custom_call.1} parent=1 // pred_fallthru
      _
    // Predicated region
    $region42: #{tpu_custom_call.1} parent=1 // pred_check
      _
    $region43: #{tpu_custom_call.1} parent=1 // pred_check_branch
      %703 = sbr.rel (0) target = $region45
    $region44: #{tpu_custom_call.1} parent=1 // pred_region
      _
    $region45: #{tpu_custom_call.1} parent=1 // pred_fallthru
      _
    %704 = vsyncpa [#allocation3], 1

</llo_original>
